<compile_context>
chip_gen: v7x
topology: tpu7x:2x2x1
jax: 0.10.0
libtpu: 0.0.40
codegen_flags: <defaults>
</compile_context>

<pallas_src>
import jax
import jax.numpy as jnp
from jax.experimental import pallas as pl
from jax.experimental.pallas import tpu as pltpu


def _pick_tile(total, preferred):
    for t in preferred:
        if total % t == 0:
            return t
    return total


def inhibitnet_kernel(x_ref, wt_ref, bt_ref, act_ref, gate_ref):
    # x_ref:    (TB, INP)   bf16 input row tile
    # wt_ref:   (INP, TN)   bf16 pre-transposed, lane-padded weight column tile
    # bt_ref:   (2, TN)     f32: row 0 = bias, row 1 = tresh
    # act_ref:  (TB, TN)    f32 sigmoid(fc)
    # gate_ref: (TB, TN)    (activated > tresh) as 0.0/1.0
    fc = jnp.dot(x_ref[...], wt_ref[...], preferred_element_type=jnp.float32)
    bt = bt_ref[...]
    fc = fc + bt[0:1, :]                    # broadcast bias row over batch rows
    activated = jax.nn.sigmoid(fc)          # f32 transcendental on the EUP
    # relu(act - t) > 0  <=>  act > t : one VPU compare instead of sub+max+cmp.
    # TODO(synk): BumpFunction's custom backward (surrogate gradient) plays no
    # role in the forward pass; forward is exactly this hard 0/1 gate.
    gate = (activated > bt[1:2, :]).astype(gate_ref.dtype)
    act_ref[...] = activated.astype(act_ref.dtype)
    gate_ref[...] = gate


def prepare_inhibitnet_params(weight, bias, tresh, *, mxu_dtype=jnp.bfloat16):
    """One-time prep (call at init, NOT per forward): transpose + lane-pad the
    weight to (inp, OUT_P) with OUT_P a multiple of 128, cast to the MXU dtype,
    and fuse bias/tresh into a single (2, OUT_P) f32 array.
    Returns (wt, bt, out)."""
    out, inp = weight.shape
    out_p = ((out + 127) // 128) * 128
    wt = jnp.zeros((inp, out_p), mxu_dtype).at[:, :out].set(
        weight.T.astype(mxu_dtype))
    # Padded tresh columns get 2.0 (> sigmoid max) so padded gate lanes are 0.
    bt = jnp.full((2, out_p), 2.0, jnp.float32)
    bt = bt.at[0, :].set(0.0)
    bt = bt.at[0, :out].set(bias.astype(jnp.float32))
    bt = bt.at[1, :out].set(tresh.astype(jnp.float32))
    return wt, bt, out


def inhibitnet_forward(x, wt, bt, out, *, tile_b=None, tile_n=None,
                       gate_dtype=jnp.float32):
    """x: (B, inp) float; wt: (inp, OUT_P) bf16; bt: (2, OUT_P) f32 (both from
    prepare_inhibitnet_params); out: true output width.
    Returns (activated, gated_bool), each (B, out)."""
    B, inp = x.shape
    inp_w, out_p = wt.shape
    assert inp == inp_w and out_p % 128 == 0 and out <= out_p

    if tile_b is None:
        # Multiple grid steps at realistic B -> software pipelining + megacore;
        # 16-row tiles keep bf16 sublane packing happy, 8 is the floor.
        tile_b = _pick_tile(B, (512, 256, 128, 64, 32, 16, 8))
    if tile_n is None:
        tile_n = _pick_tile(out_p, (512, 256, 128))
    assert B % tile_b == 0 and out_p % tile_n == 0
    assert tile_b == B or tile_b % 8 == 0, "tile_b must be a sublane multiple"

    x = x.astype(wt.dtype)  # bf16 into the MXU; halves x HBM/VMEM traffic

    n_blocks = out_p // tile_n
    b_blocks = B // tile_b
    # Outer axis = output columns, inner axis = batch rows: the weight /
    # bias-tresh block index is constant along the inner axis, so those tiles
    # stay resident in VMEM and are fetched from HBM exactly once per column
    # block (instead of once per grid step).
    grid = (n_blocks, b_blocks)

    gate_bytes = jnp.dtype(gate_dtype).itemsize
    bytes_accessed = (x.size * x.dtype.itemsize * n_blocks   # x per column blk
                      + wt.size * wt.dtype.itemsize          # weight fetched 1x
                      + bt.size * bt.dtype.itemsize
                      + B * out_p * 4                        # activated (f32)
                      + B * out_p * gate_bytes)              # gate
    cost = pl.CostEstimate(flops=2 * B * inp * out_p,
                           transcendentals=B * out_p,
                           bytes_accessed=int(bytes_accessed))

    act, gate = pl.pallas_call(
        inhibitnet_kernel,
        out_shape=(
            jax.ShapeDtypeStruct((B, out_p), jnp.float32),
            jax.ShapeDtypeStruct((B, out_p), gate_dtype),
        ),
        grid_spec=pltpu.PrefetchScalarGridSpec(
            num_scalar_prefetch=0,
            grid=grid,
            in_specs=[
                pl.BlockSpec((tile_b, inp), lambda n, b: (b, 0)),   # x rows
                pl.BlockSpec((inp, tile_n), lambda n, b: (0, n)),   # W^T cols
                pl.BlockSpec((2, tile_n), lambda n, b: (0, n)),     # bias/tresh
            ],
            out_specs=[
                pl.BlockSpec((tile_b, tile_n), lambda n, b: (b, n)),
                pl.BlockSpec((tile_b, tile_n), lambda n, b: (b, n)),
            ],
        ),
        compiler_params=pltpu.CompilerParams(
            dimension_semantics=("parallel", "parallel"),
        ),
        cost_estimate=cost,
    )(x, wt, bt)

    if out != out_p:
        act = act[:, :out]
        gate = gate[:, :out]
    return act, gate


if __name__ == "__main__":
    # Small shapes consistent with the module: batch=8, inp=32, out=16.
    B, INP, OUT = 8, 32, 16

    key = jax.random.PRNGKey(0)
    kx, kw, kb, kt = jax.random.split(key, 4)

    x = jax.random.normal(kx, (B, INP), dtype=jnp.float32)

    # Deterministic parameter init (mirrors nn.Linear default-ish + tresh init).
    limit = 1.0 / jnp.sqrt(jnp.float32(INP))
    weight = jax.random.uniform(kw, (OUT, INP), minval=-limit, maxval=limit,
                                dtype=jnp.float32)
    bias = jax.random.uniform(kb, (OUT,), minval=-limit, maxval=limit,
                              dtype=jnp.float32)
    mu, sigma = 0.7, 0.2
    tresh = jnp.abs(jax.random.uniform(kt, (OUT,), dtype=jnp.float32)) * sigma + mu

    # One-time parameter prep (transpose / pad / fuse) — out of the call path.
    wt, bt, out_dim = prepare_inhibitnet_params(weight, bias, tresh)

    act, gate = inhibitnet_forward(x, wt, bt, out_dim)
    jax.block_until_ready((act, gate))

    # Reference in plain JAX (f32). bf16 MXU inputs -> small tolerance on act;
    # the gate is checked exactly against the kernel's own activated output and
    # against the f32 reference away from the bf16-ambiguous band around tresh.
    fc_ref = x @ weight.T + bias
    act_ref = jax.nn.sigmoid(fc_ref)
    gate_ref = (jnp.maximum(act_ref - tresh, 0.0) > 0.0).astype(jnp.float32)

    assert act.shape == (B, OUT) and gate.shape == (B, OUT)
    assert jnp.allclose(act, act_ref, atol=2e-2), "activated mismatch"
    gate_self = (act > tresh[None, :]).astype(gate.dtype)
    assert jnp.array_equal(gate, gate_self), "gate inconsistent with activated"
    safe = jnp.abs(act_ref - tresh[None, :]) > 1e-2
    assert bool(jnp.all(jnp.where(safe, gate.astype(jnp.float32) == gate_ref,
                                  True))), "gated_bool mismatch"

    print("KERNEL_OK")
</pallas_src>

<mosaic_0001>
module attributes {stable_mosaic.version = 11 : i64} {
  func.func @inhibitnet_kernel(%arg0: i32, %arg1: i32, %arg2: memref<8x32xbf16, #tpu.memory_space<vmem>>, %arg3: memref<32x128xbf16, #tpu.memory_space<vmem>>, %arg4: memref<2x128xf32, #tpu.memory_space<vmem>>, %arg5: memref<8x128xf32, #tpu.memory_space<vmem>>, %arg6: memref<8x128xf32, #tpu.memory_space<vmem>>) attributes {dimension_semantics = [#tpu.dimension_semantics<parallel>, #tpu.dimension_semantics<parallel>], iteration_bounds = array<i64: 1, 1>, scalar_prefetch = 0 : i64, scratch_operands = 0 : i64, tpu.core_type = #tpu.core_type<tc>, window_params = [{transform_indices = @transform_0, window_bounds = array<i64: 8, 32>}, {transform_indices = @transform_1, window_bounds = array<i64: 32, 128>}, {transform_indices = @transform_2, window_bounds = array<i64: 2, 128>}, {transform_indices = @transform_3, window_bounds = array<i64: 8, 128>}, {transform_indices = @transform_4, window_bounds = array<i64: 8, 128>}]} {
    %c0 = arith.constant 0 : index
    %c0_0 = arith.constant 0 : index
    %0 = vector.load %arg2[%c0, %c0_0] : memref<8x32xbf16, #tpu.memory_space<vmem>>, vector<8x32xbf16>
    %c0_1 = arith.constant 0 : index
    %c0_2 = arith.constant 0 : index
    %1 = vector.load %arg3[%c0_1, %c0_2] : memref<32x128xbf16, #tpu.memory_space<vmem>>, vector<32x128xbf16>
    %cst = arith.constant dense<0.000000e+00> : vector<8x128xf32>
    %2 = tpu.matmul %0, %1, %cst {dimension_numbers = #tpu.dot_dimension_numbers<[1], [0], [0], [1], [0, 0, 1, 1], [], []>} : vector<8x32xbf16>, vector<32x128xbf16>, vector<8x128xf32> -> vector<8x128xf32>
    %c0_3 = arith.constant 0 : index
    %c0_4 = arith.constant 0 : index
    %3 = vector.load %arg4[%c0_3, %c0_4] : memref<2x128xf32, #tpu.memory_space<vmem>>, vector<2x128xf32>
    %4 = vector.extract_strided_slice %3 {offsets = [0, 0], sizes = [1, 128], strides = [1, 1]} : vector<2x128xf32> to vector<1x128xf32>
    %5 = vector.broadcast %4 : vector<1x128xf32> to vector<8x128xf32>
    %6 = arith.addf %2, %5 : vector<8x128xf32>
    %7 = arith.negf %6 : vector<8x128xf32>
    %8 = math.exp %7 : vector<8x128xf32>
    %cst_5 = arith.constant 1.000000e+00 : f32
    %9 = vector.broadcast %cst_5 : f32 to vector<8x128xf32>
    %10 = arith.addf %9, %8 : vector<8x128xf32>
    %11 = arith.divf %9, %10 : vector<8x128xf32>
    %12 = vector.extract_strided_slice %3 {offsets = [1, 0], sizes = [1, 128], strides = [1, 1]} : vector<2x128xf32> to vector<1x128xf32>
    %13 = vector.broadcast %12 : vector<1x128xf32> to vector<8x128xf32>
    %14 = arith.cmpf ogt, %11, %13 : vector<8x128xf32>
    %15 = arith.extui %14 : vector<8x128xi1> to vector<8x128xi32>
    %16 = arith.sitofp %15 : vector<8x128xi32> to vector<8x128xf32>
    %c0_6 = arith.constant 0 : index
    %c0_7 = arith.constant 0 : index
    %17 = vector.load %arg5[%c0_6, %c0_7] : memref<8x128xf32, #tpu.memory_space<vmem>>, vector<8x128xf32>
    tpu.vector_store %arg5[%c0_6, %c0_7], %11 {strides = array<i32>} : memref<8x128xf32, #tpu.memory_space<vmem>>, vector<8x128xf32>,
    %c0_8 = arith.constant 0 : index
    %c0_9 = arith.constant 0 : index
    %18 = vector.load %arg6[%c0_8, %c0_9] : memref<8x128xf32, #tpu.memory_space<vmem>>, vector<8x128xf32>
    tpu.vector_store %arg6[%c0_8, %c0_9], %16 {strides = array<i32>} : memref<8x128xf32, #tpu.memory_space<vmem>>, vector<8x128xf32>,
    return
  }
  func.func @transform_0(%arg0: i32, %arg1: i32) -> (i32, i32) {
    %c0_i32 = arith.constant 0 : i32
    %c0_i32_0 = arith.constant 0 : i32
    return %arg1, %c0_i32 : i32, i32
  }
  func.func @transform_1(%arg0: i32, %arg1: i32) -> (i32, i32) {
    %c0_i32 = arith.constant 0 : i32
    %c0_i32_0 = arith.constant 0 : i32
    return %c0_i32, %arg0 : i32, i32
  }
  func.func @transform_2(%arg0: i32, %arg1: i32) -> (i32, i32) {
    %c0_i32 = arith.constant 0 : i32
    %c0_i32_0 = arith.constant 0 : i32
    return %c0_i32, %arg0 : i32, i32
  }
  func.func @transform_3(%arg0: i32, %arg1: i32) -> (i32, i32) {
    %c0_i32 = arith.constant 0 : i32
    return %arg1, %arg0 : i32, i32
  }
  func.func @transform_4(%arg0: i32, %arg1: i32) -> (i32, i32) {
    %c0_i32 = arith.constant 0 : i32
    return %arg1, %arg0 : i32, i32
  }
}

</mosaic_0001>

<llo_original>
// kernel: tpu_custom_call.1
$region0: #{tpu_custom_call.1}
  #allocation0 [shape = 'u32[]', space=smem, size = 0x4, offset = 0x4, fixed_abs, tag = 'smem constant byte address 0x4 - core index']
  #allocation1 [shape = 'u32[144,128]{1,0:T(1,128)}', space=vmem, size = 0x12000, scoped, tag = 'internal scratch']
  %s0 = inlined_call_operand.hbm [shape: bf16[8,32], index: 0, kind: input, shape index: {}]
  %s1 = inlined_call_operand.hbm [shape: bf16[32,128], index: 1, kind: input, shape index: {}]
  %s2 = inlined_call_operand.vmem [shape: f32[2,128], index: 2, kind: input, shape index: {}]
  %s3 = inlined_call_operand.hbm [shape: f32[8,128], index: 3, kind: output, shape index: {0}]
  %s4 = inlined_call_operand.hbm [shape: f32[8,128], index: 4, kind: output, shape index: {1}]
  %5 = xla_tuple %s3, %s4
  %s6 = sld [smem:[#allocation0]]
  $region38: #{tpu_custom_call.1} parent=0
    _
  %s8 = ssub.s32 1, %s6
  %s9 = scalar_select 0, %s8, %s6
  $region1: #{tpu_custom_call.1} parent=0
    #allocation2 [shape = 'u8[2048]{0}', space=vmem, size = 0x800, scoped, tag = 'input window, operand 0, single buffered']
    #allocation3 [shape = 's32[1]{0}', space=sflag, size = 0x4, scoped, tag = 'scoped memory for tpu_custom_call.1']
    #allocation4 [shape = 's32[1]{0}', space=sflag, size = 0x4, scoped, tag = 'scoped memory for tpu_custom_call.1']
    #allocation5 [shape = 'u8[8192]{0}', space=vmem, size = 0x2000, scoped, tag = 'input window, operand 1, single buffered']
    #allocation6 [shape = 's32[1]{0}', space=sflag, size = 0x4, scoped, tag = 'scoped memory for tpu_custom_call.1']
    #allocation7 [shape = 'u8[4096]{0}', space=vmem, size = 0x1000, scoped, tag = 'output window, operand 0, single buffered']
    #allocation8 [shape = 'u8[4096]{0}', space=vmem, size = 0x1000, scoped, tag = 'output window, operand 1, single buffered']
    #allocation9 [shape = 's32[1]{0}', space=sflag, size = 0x4, scoped, tag = 'scoped memory for tpu_custom_call.1']
    %10 = vsyncpa [#allocation3], 0
    %11 = vsyncpa [#allocation6], 0
    %12 = vsyncpa [#allocation4], 0
    %13 = vsyncpa [#allocation9], 0
    // Predicated region
    $region2: #{tpu_custom_call.1} parent=1 // pred_check
      _
    $region3: #{tpu_custom_call.1} parent=1 // pred_check_branch
      %15 = sbr.rel (0) target = $region5
    $region4: #{tpu_custom_call.1} parent=1 // pred_region
      %s17 = ssub.s32 64, 64
      %18 = vsyncadd [#allocation3], %s17
      %s20 = sshll.u32 [#allocation2], 4
      %s21 = int_to_ptr.vmem [resolvable:$true] %s20
      %23 = dma.hbm_to_vmem [thread:$0]  %s0, 64, %s21, [#allocation3]
    $region5: #{tpu_custom_call.1} parent=1 // pred_fallthru
      _
    // Predicated region
    $region6: #{tpu_custom_call.1} parent=1 // pred_check
      _
    $region7: #{tpu_custom_call.1} parent=1 // pred_check_branch
      %25 = sbr.rel (0) target = $region9
    $region8: #{tpu_custom_call.1} parent=1 // pred_region
      %s27 = ssub.s32 256, 256
      %28 = vsyncadd [#allocation6], %s27
      %s29 = sshll.u32 [#allocation5], 4
      %s30 = int_to_ptr.vmem [resolvable:$true] %s29
      %35 = dma.hbm_to_vmem [thread:$0]  %s1, 256, %s30, [#allocation6], 64, 64, 4
    $region9: #{tpu_custom_call.1} parent=1 // pred_fallthru
      _
    // Predicated region
    $region10: #{tpu_custom_call.1} parent=1 // pred_check
      _
    $region11: #{tpu_custom_call.1} parent=1 // pred_check_branch
      %37 = sbr.rel (0) target = $region13
    $region12: #{tpu_custom_call.1} parent=1 // pred_region
      _
    $region13: #{tpu_custom_call.1} parent=1 // pred_fallthru
      _
    // Predicated region
    $region14: #{tpu_custom_call.1} parent=1 // pred_check
      _
    $region15: #{tpu_custom_call.1} parent=1 // pred_check_branch
      %39 = sbr.rel (0) target = $region17
    $region16: #{tpu_custom_call.1} parent=1 // pred_region
      %40 = dma.done [#allocation3], 64
    $region17: #{tpu_custom_call.1} parent=1 // pred_fallthru
      _
    // Predicated region
    $region18: #{tpu_custom_call.1} parent=1 // pred_check
      _
    $region19: #{tpu_custom_call.1} parent=1 // pred_check_branch
      %42 = sbr.rel (0) target = $region21
    $region20: #{tpu_custom_call.1} parent=1 // pred_region
      %43 = dma.done [#allocation6], 256
    $region21: #{tpu_custom_call.1} parent=1 // pred_fallthru
      _
    %v45 = vld [vmem:[#allocation2] sm:$0xf]
    %v46 = vld [vmem:[#allocation5] sm:$0xf]
    %v47 = vld [vmem:[#allocation5 + $0x4] sm:$0xf]
    %v48 = vld [vmem:[#allocation5 + $0x8] sm:$0xf]
    %v49 = vld [vmem:[#allocation5 + $0xc] sm:$0xf]
    %v50 = vld [vmem:[%s2] sm:$0x3]
    %v51 = vlaneseq
    %v52 = vshrl.u32 %v51, 7
    %v53 = vsub.s32 0, %v52
    %v54 = vrot.slane %v50, %v53
    %v59 = vunpack.c.l.b16 %v46
    %v60 = vunpack.c.l.b16 %v47
    %v61 = vunpack.c.l.b16 %v48
    %v62 = vunpack.c.l.b16 %v49
    %v63 = vpack.c.b16 %v60, %v59
    %v64 = vpack.c.b16 %v62, %v61
    %vm67 = vcmask 261120
    %v69 = vsel %vm67, %v45, 0
    %71 = vmatprep.subr.bf16.mxu0 0
    %72 = vmatpush1.bf16.msra.mxu0 %v63
    %73 = vmatprep.subr.bf16.mxu0 0
    %74 = vmatpush1.bf16.msra.mxu0 %v64
    %75 = vmatprep.subr.bf16.mxu0 0
    %76 = vmatpush1.bf16.msra.mxu0 0
    %77 = vmatprep.subr.bf16.mxu0 0
    %78 = vmatpush1.bf16.msra.mxu0 0
    %79 = vmatprep.subr.bf16.mxu0 0
    %80 = vmatpush1.bf16.msra.mxu0 0
    %81 = vmatprep.subr.bf16.mxu0 0
    %82 = vmatpush1.bf16.msra.mxu0 0
    %83 = vmatprep.subr.bf16.mxu0 0
    %84 = vmatpush1.bf16.msra.mxu0 0
    %85 = vmatprep.subr.bf16.mxu0 0
    %86 = vmatpush1.bf16.msra.mxu0 0
    %87 = vmatprep.subr.bf16.mxu0 0
    %88 = vmatpush1.bf16.msra.mxu0 0
    %89 = vmatprep.subr.bf16.mxu0 0
    %90 = vmatpush1.bf16.msra.mxu0 0
    %91 = vmatprep.subr.bf16.mxu0 0
    %92 = vmatpush1.bf16.msra.mxu0 0
    %93 = vmatprep.subr.bf16.mxu0 0
    %94 = vmatpush1.bf16.msra.mxu0 0
    %95 = vmatprep.subr.bf16.mxu0 0
    %96 = vmatpush1.bf16.msra.mxu0 0
    %97 = vmatprep.subr.bf16.mxu0 0
    %98 = vmatpush1.bf16.msra.mxu0 0
    %99 = vmatprep.subr.bf16.mxu0 0
    %100 = vmatpush1.bf16.msra.mxu0 0
    %101 = vmatprep.subr.bf16.mxu0 0
    %102 = vmatpush1.bf16.msra.mxu0 0
    %103 = vmatprep.mubr.bf16.mxu0 0
    %104 = vmatmul.mubr.bf16.gmra.mrb[0].mxu0 %v69
    %v105 = vpop.f32.mrb[0].mxu0
    %v106 = vadd.f32 %v54, %v105
    %v107 = vpop.f32.mrb[0].mxu0
    %v108 = vpop.f32.mrb[0].mxu0
    %v109 = vpop.f32.mrb[0].mxu0
    %110 = vdwg.mxu0
    %v111 = vxor.u32 %v106, 2147483648
    %v112 = vmul.f32 %v111, 1.442695
    %v113 = vpow.pop %v112
    %v114 = vadd.f32 %v113, 1.0
    %v115 = vrcp.pop %v114
    %v116 = vmul.f32 1.0, %v115
    %v117 = vlaneseq
    %v118 = vshrl.u32 %v117, 7
    %v119 = vsub.s32 1, %v118
    %v120 = vrot.slane %v50, %v119
    %vm121 = vcmp.gt.f32.partialorder %v116, %v120
    %v122 = vsel %vm121, 1, 0
    %v123 = vcvt.s32.f32 %v122
    %124 = vst [vmem:[#allocation7] sm:$0xff] %v116
    %125 = vst [vmem:[#allocation8] sm:$0xff] %v123
    // Predicated region
    $region22: #{tpu_custom_call.1} parent=1 // pred_check
      _
    $region23: #{tpu_custom_call.1} parent=1 // pred_check_branch
      %127 = sbr.rel (0) target = $region25
    $region24: #{tpu_custom_call.1} parent=1 // pred_region
      %s129 = ssub.s32 128, 128
      %130 = vsyncadd [#allocation4], %s129
      %s132 = sshll.u32 [#allocation7], 4
      %s133 = int_to_ptr.vmem [resolvable:$true] %s132
      %135 = dma.vmem_to_hbm [thread:$0]  %s133, 128, %s3, [#allocation4]
    $region25: #{tpu_custom_call.1} parent=1 // pred_fallthru
      _
    // Predicated region
    $region26: #{tpu_custom_call.1} parent=1 // pred_check
      _
    $region27: #{tpu_custom_call.1} parent=1 // pred_check_branch
      %137 = sbr.rel (0) target = $region29
    $region28: #{tpu_custom_call.1} parent=1 // pred_region
      %s139 = ssub.s32 128, 128
      %140 = vsyncadd [#allocation9], %s139
      %s142 = sshll.u32 [#allocation8], 4
      %s143 = int_to_ptr.vmem [resolvable:$true] %s142
      %145 = dma.vmem_to_hbm [thread:$0]  %s143, 128, %s4, [#allocation9]
    $region29: #{tpu_custom_call.1} parent=1 // pred_fallthru
      _
    // Predicated region
    $region30: #{tpu_custom_call.1} parent=1 // pred_check
      _
    $region31: #{tpu_custom_call.1} parent=1 // pred_check_branch
      %147 = sbr.rel (0) target = $region33
    $region32: #{tpu_custom_call.1} parent=1 // pred_region
      %148 = dma.done [#allocation4], 128
    $region33: #{tpu_custom_call.1} parent=1 // pred_fallthru
      _
    // Predicated region
    $region34: #{tpu_custom_call.1} parent=1 // pred_check
      _
    $region35: #{tpu_custom_call.1} parent=1 // pred_check_branch
      %150 = sbr.rel (0) target = $region37
    $region36: #{tpu_custom_call.1} parent=1 // pred_region
      %151 = dma.done [#allocation9], 128
    $region37: #{tpu_custom_call.1} parent=1 // pred_fallthru
      _
    %152 = vsyncpa [#allocation3], 1
    %153 = vsyncpa [#allocation6], 1
    %154 = vsyncpa [#allocation4], 1
    %155 = vsyncpa [#allocation9], 1

</llo_original>
